<compile_context>
chip_gen: v7x
topology: tpu7x:2x2x1
jax: 0.10.0
libtpu: 0.0.40
codegen_flags: <defaults>
</compile_context>

<pallas_src>
import functools

import jax
import jax.numpy as jnp
from jax.experimental import pallas as pl
from jax.experimental.pallas import tpu as pltpu

HIDDEN = 128   # inner 1x1-conv width (fixed by the module)


def _round_up(a, b):
    return ((a + b - 1) // b) * b


def _attention_kernel(nb, g_ref, x_ref, w_ref, b_ref, wphi_ref, bphi_ref, o_ref):
    """One (batch-block, spatial-tile) step.

    g_ref    : (Nb, Cg, T)      'g' tile, spatial flattened onto lanes (f32)
    x_ref    : (Nb, Cx, T)      'x' tile (f32)
    w_ref    : (HIDDEN, Cg+Cx)  [g_conv1 | x_conv1] weights fused, bf16
    b_ref    : (HIDDEN, 1)      folded hidden bias (bg + bx), f32
    wphi_ref : (HIDDEN, 1)      phi weight, f32
    bphi_ref : (1, 1)           phi bias, f32
    o_ref    : (Nb, Cx, T)      output tile
    """
    w = w_ref[...]                                   # hoisted, reused over Nb
    for b in range(nb):                              # static unroll (Nb small)
        g = g_ref[b]                                 # (Cg, T) f32
        x = x_ref[b]                                 # (Cx, T) f32

        # Single K = Cg+Cx = 128 MXU matmul: h = relu(W_full @ [g; x] + b).
        # bf16 operands, f32 accumulation.
        gx = jnp.concatenate([g, x], axis=0).astype(jnp.bfloat16)   # (128, T)
        h = jnp.dot(w, gx, preferred_element_type=jnp.float32)      # (128, T)
        h = jnp.maximum(h + b_ref[...], 0.0)

        # phi (128 -> 1) as VPU multiply + sublane reduce; MXU has no slack
        # issue here and the kernel is HBM-bound, so keep it off the MXU.
        logit = jnp.sum(h * wphi_ref[...], axis=0, keepdims=True) + bphi_ref[...]
        gate = pl.reciprocal(1.0 + jnp.exp(-logit), approx=True)    # sigmoid, EUP

        # out = x * gate (broadcast over channels), lane-dense store.
        o_ref[b] = (x * gate).astype(o_ref.dtype)


def attention_forward(g_nchw, x_nchw, params, tile_hw=2048):
    """AttentionBlock forward.  g: (N, Cg, H, W), x: (N, Cx, H, W)."""
    N, Cg, H, W = g_nchw.shape
    Nx, Cx, Hx, Wx = x_nchw.shape
    assert (N, H, W) == (Nx, Hx, Wx)
    HW = H * W

    # Free reshape (no transpose): spatial onto the lane axis.
    g = g_nchw.reshape(N, Cg, HW)
    x = x_nchw.reshape(N, Cx, HW)

    # Spatial tile: multiple of 128 and <= HW (no wrapper padding; a ragged
    # last tile is handled by Pallas masking).
    if HW >= 128:
        T = min(_round_up(tile_hw, 128), (HW // 128) * 128)
    else:
        T = HW                         # tiny map: block == full spatial extent
    num_t = pl.cdiv(HW, T)

    # v7x has 2 TensorCores: when N == 1 make sure there are >= 2 grid steps.
    if N == 1 and num_t == 1 and T > 128:
        T = max(128, _round_up(pl.cdiv(HW, 2), 128))
        num_t = pl.cdiv(HW, T)

    # Small feature maps: fold several batch elements into one block so DMAs
    # stay large and per-grid-step overhead is amortized, while keeping
    # >= 2 batch blocks and exact divisibility (no ragged batch blocks).
    Nb = 1
    if num_t == 1 and N > 2:
        cap = min(max(1, tile_hw // max(T, 1)), N // 2)
        for c in range(1, cap + 1):
            if N % c == 0:
                Nb = c
    num_b = N // Nb

    # Fused / folded parameters (tiny, prepared once per call).
    w_full = jnp.concatenate(
        [params["wg"], params["wx"]], axis=1).astype(jnp.bfloat16)   # (128, Cg+Cx)
    b_h = (params["bg"] + params["bx"]).reshape(HIDDEN, 1).astype(jnp.float32)
    wphi = params["wphi"].reshape(HIDDEN, 1).astype(jnp.float32)
    bphi = params["bphi"].reshape(1, 1).astype(jnp.float32)

    kernel = functools.partial(_attention_kernel, Nb)

    out = pl.pallas_call(
        kernel,
        out_shape=jax.ShapeDtypeStruct((N, Cx, HW), x_nchw.dtype),
        grid_spec=pl.GridSpec(
            grid=(num_b, num_t),
            in_specs=[
                pl.BlockSpec((Nb, Cg, T), lambda b, t: (b, 0, t)),
                pl.BlockSpec((Nb, Cx, T), lambda b, t: (b, 0, t)),
                pl.BlockSpec((HIDDEN, Cg + Cx), lambda b, t: (0, 0)),
                pl.BlockSpec((HIDDEN, 1), lambda b, t: (0, 0)),
                pl.BlockSpec((HIDDEN, 1), lambda b, t: (0, 0)),
                pl.BlockSpec((1, 1), lambda b, t: (0, 0)),
            ],
            out_specs=pl.BlockSpec((Nb, Cx, T), lambda b, t: (b, 0, t)),
        ),
        compiler_params=pltpu.CompilerParams(
            dimension_semantics=("parallel", "parallel"),
            vmem_limit_bytes=32 * 1024 * 1024,   # double-buffered tiles stay small
        ),
    )(g, x, w_full, b_h, wphi, bphi)

    return out.reshape(N, Cx, H, W)


def _reference_forward(g_nchw, x_nchw, params):
    """Pure-JAX f32 HIGHEST-precision reference for correctness checking."""
    N, Cg, H, W = g_nchw.shape
    Cx = x_nchw.shape[1]
    hi = jax.lax.Precision.HIGHEST
    g = g_nchw.reshape(N, Cg, H * W)
    x = x_nchw.reshape(N, Cx, H * W)
    g1 = jnp.einsum("kc,ncp->nkp", params["wg"], g, precision=hi) \
        + params["bg"][None, :, None]
    x1 = jnp.einsum("kc,ncp->nkp", params["wx"], x, precision=hi) \
        + params["bx"][None, :, None]
    h = jnp.maximum(g1 + x1, 0.0)
    logit = jnp.einsum("k,nkp->np", params["wphi"], h, precision=hi) \
        + params["bphi"]
    gate = jax.nn.sigmoid(logit)[:, None, :]
    return (x * gate).reshape(N, Cx, H, W)


def init_params(key, g_in, x_in):
    """Weights stored kernel-ready as (out, in); biases as 1-D / scalar."""
    ks = jax.random.split(key, 6)
    return {
        "wg": jax.random.normal(ks[0], (HIDDEN, g_in), jnp.float32)
        / jnp.sqrt(g_in),
        "bg": 0.01 * jax.random.normal(ks[1], (HIDDEN,), jnp.float32),
        "wx": jax.random.normal(ks[2], (HIDDEN, x_in), jnp.float32)
        / jnp.sqrt(x_in),
        "bx": 0.01 * jax.random.normal(ks[3], (HIDDEN,), jnp.float32),
        "wphi": jax.random.normal(ks[4], (HIDDEN,), jnp.float32)
        / jnp.sqrt(HIDDEN),
        "bphi": 0.01 * jax.random.normal(ks[5], (), jnp.float32),
    }


if __name__ == "__main__":
    key = jax.random.PRNGKey(0)
    k_g, k_x, k_p = jax.random.split(key, 3)

    # Small shapes consistent with the module (g_in = x_in = 64 defaults).
    N, C, H, W = 2, 64, 16, 16
    g = jax.random.normal(k_g, (N, C, H, W), jnp.float32)
    x = jax.random.normal(k_x, (N, C, H, W), jnp.float32)
    params = init_params(k_p, C, C)

    out = jax.block_until_ready(attention_forward(g, x, params))
    ref = jax.block_until_ready(_reference_forward(g, x, params))

    assert out.shape == (N, C, H, W)
    # Tolerance accounts for bf16 MXU operands (f32 accumulate) and the
    # approximate EUP reciprocal in the sigmoid; the gate sits after a
    # sigmoid so the end-to-end sensitivity is low.
    assert jnp.allclose(out, ref, atol=2e-2, rtol=2e-2), (
        float(jnp.max(jnp.abs(out - ref))))
    print("KERNEL_OK")
</pallas_src>

<mosaic_0001>
module attributes {stable_mosaic.version = 11 : i64} {
  func.func @_attention_kernel(%arg0: i32, %arg1: i32, %arg2: memref<1x64x256xf32, #tpu.memory_space<vmem>>, %arg3: memref<1x64x256xf32, #tpu.memory_space<vmem>>, %arg4: memref<128x128xbf16, #tpu.memory_space<vmem>>, %arg5: memref<128x1xf32, #tpu.memory_space<vmem>>, %arg6: memref<128x1xf32, #tpu.memory_space<vmem>>, %arg7: memref<1x1xf32, #tpu.memory_space<vmem>>, %arg8: memref<1x64x256xf32, #tpu.memory_space<vmem>>) attributes {dimension_semantics = [#tpu.dimension_semantics<parallel>, #tpu.dimension_semantics<parallel>], iteration_bounds = array<i64: 2, 1>, scalar_prefetch = 0 : i64, scratch_operands = 0 : i64, tpu.core_type = #tpu.core_type<tc>, window_params = [{transform_indices = @transform_0, window_bounds = array<i64: 1, 64, 256>}, {transform_indices = @transform_1, window_bounds = array<i64: 1, 64, 256>}, {pipeline_mode = #tpu.pipeline_mode<synchronous>, transform_indices = @transform_2, window_bounds = array<i64: 128, 128>}, {pipeline_mode = #tpu.pipeline_mode<synchronous>, transform_indices = @transform_3, window_bounds = array<i64: 128, 1>}, {pipeline_mode = #tpu.pipeline_mode<synchronous>, transform_indices = @transform_4, window_bounds = array<i64: 128, 1>}, {pipeline_mode = #tpu.pipeline_mode<synchronous>, transform_indices = @transform_5, window_bounds = array<i64: 1, 1>}, {transform_indices = @transform_6, window_bounds = array<i64: 1, 64, 256>}]} {
    %c0 = arith.constant 0 : index
    %c0_0 = arith.constant 0 : index
    %0 = vector.load %arg4[%c0, %c0_0] : memref<128x128xbf16, #tpu.memory_space<vmem>>, vector<128x128xbf16>
    %c0_1 = arith.constant 0 : index
    %c0_2 = arith.constant 0 : index
    %c0_3 = arith.constant 0 : index
    %1 = vector.load %arg2[%c0_1, %c0_2, %c0_3] : memref<1x64x256xf32, #tpu.memory_space<vmem>>, vector<1x64x256xf32>
    %2 = vector.shape_cast %1 : vector<1x64x256xf32> to vector<64x256xf32>
    %c0_4 = arith.constant 0 : index
    %c0_5 = arith.constant 0 : index
    %c0_6 = arith.constant 0 : index
    %3 = vector.load %arg3[%c0_4, %c0_5, %c0_6] : memref<1x64x256xf32, #tpu.memory_space<vmem>>, vector<1x64x256xf32>
    %4 = vector.shape_cast %3 : vector<1x64x256xf32> to vector<64x256xf32>
    %5 = tpu.concatenate %2, %4 in 0 : vector<64x256xf32>, vector<64x256xf32> -> vector<128x256xf32>
    %6 = arith.truncf %5 : vector<128x256xf32> to vector<128x256xbf16>
    %cst = arith.constant dense<0.000000e+00> : vector<128x256xf32>
    %7 = tpu.matmul %0, %6, %cst {dimension_numbers = #tpu.dot_dimension_numbers<[1], [0], [0], [1], [0, 0, 1, 1], [], []>} : vector<128x128xbf16>, vector<128x256xbf16>, vector<128x256xf32> -> vector<128x256xf32>
    %c0_7 = arith.constant 0 : index
    %c0_8 = arith.constant 0 : index
    %8 = vector.load %arg5[%c0_7, %c0_8] : memref<128x1xf32, #tpu.memory_space<vmem>>, vector<128x1xf32>
    %9 = vector.broadcast %8 : vector<128x1xf32> to vector<128x256xf32>
    %10 = arith.addf %7, %9 : vector<128x256xf32>
    %cst_9 = arith.constant 0.000000e+00 : f32
    %11 = vector.broadcast %cst_9 : f32 to vector<128x256xf32>
    %12 = arith.maximumf %10, %11 : vector<128x256xf32>
    %c0_10 = arith.constant 0 : index
    %c0_11 = arith.constant 0 : index
    %13 = vector.load %arg6[%c0_10, %c0_11] : memref<128x1xf32, #tpu.memory_space<vmem>>, vector<128x1xf32>
    %14 = vector.broadcast %13 : vector<128x1xf32> to vector<128x256xf32>
    %15 = arith.mulf %12, %14 : vector<128x256xf32>
    %cst_12 = arith.constant dense<0.000000e+00> : vector<256xf32>
    %16 = vector.multi_reduction <add>, %15, %cst_12 [0] : vector<128x256xf32> to vector<256xf32>
    %17 = vector.shape_cast %16 : vector<256xf32> to vector<1x256xf32>
    %c0_13 = arith.constant 0 : index
    %c0_14 = arith.constant 0 : index
    %18 = vector.load %arg7[%c0_13, %c0_14] : memref<1x1xf32, #tpu.memory_space<vmem>>, vector<1x1xf32>
    %19 = vector.broadcast %18 : vector<1x1xf32> to vector<1x256xf32>
    %20 = arith.addf %17, %19 : vector<1x256xf32>
    %cst_15 = arith.constant 0.000000e+00 : f32
    %21 = vector.broadcast %cst_15 : f32 to vector<1x256xf32>
    %22 = arith.subf %21, %20 : vector<1x256xf32>
    %23 = math.exp %22 : vector<1x256xf32>
    %cst_16 = arith.constant 1.000000e+00 : f32
    %24 = vector.broadcast %cst_16 : f32 to vector<1x256xf32>
    %25 = arith.addf %24, %23 : vector<1x256xf32>
    %26 = tpu.reciprocal %25 {approx = true} : vector<1x256xf32> -> vector<1x256xf32>
    %27 = vector.broadcast %26 : vector<1x256xf32> to vector<64x256xf32>
    %28 = arith.mulf %4, %27 : vector<64x256xf32>
    %c0_17 = arith.constant 0 : index
    %c0_18 = arith.constant 0 : index
    %c0_19 = arith.constant 0 : index
    %29 = vector.load %arg8[%c0_17, %c0_18, %c0_19] : memref<1x64x256xf32, #tpu.memory_space<vmem>>, vector<1x64x256xf32>
    %30 = vector.shape_cast %29 : vector<1x64x256xf32> to vector<64x256xf32>
    %31 = vector.shape_cast %28 : vector<64x256xf32> to vector<1x64x256xf32>
    tpu.vector_store %arg8[%c0_17, %c0_18, %c0_19], %31 {strides = array<i32>} : memref<1x64x256xf32, #tpu.memory_space<vmem>>, vector<1x64x256xf32>,
    return
  }
  func.func @transform_0(%arg0: i32, %arg1: i32) -> (i32, i32, i32) {
    %c0_i32 = arith.constant 0 : i32
    %c0_i32_0 = arith.constant 0 : i32
    return %arg0, %c0_i32, %arg1 : i32, i32, i32
  }
  func.func @transform_1(%arg0: i32, %arg1: i32) -> (i32, i32, i32) {
    %c0_i32 = arith.constant 0 : i32
    %c0_i32_0 = arith.constant 0 : i32
    return %arg0, %c0_i32, %arg1 : i32, i32, i32
  }
  func.func @transform_2(%arg0: i32, %arg1: i32) -> (i32, i32) {
    %c0_i32 = arith.constant 0 : i32
    %c0_i32_0 = arith.constant 0 : i32
    %c0_i32_1 = arith.constant 0 : i32
    return %c0_i32, %c0_i32_0 : i32, i32
  }
  func.func @transform_3(%arg0: i32, %arg1: i32) -> (i32, i32) {
    %c0_i32 = arith.constant 0 : i32
    %c0_i32_0 = arith.constant 0 : i32
    %c0_i32_1 = arith.constant 0 : i32
    return %c0_i32, %c0_i32_0 : i32, i32
  }
  func.func @transform_4(%arg0: i32, %arg1: i32) -> (i32, i32) {
    %c0_i32 = arith.constant 0 : i32
    %c0_i32_0 = arith.constant 0 : i32
    %c0_i32_1 = arith.constant 0 : i32
    return %c0_i32, %c0_i32_0 : i32, i32
  }
  func.func @transform_5(%arg0: i32, %arg1: i32) -> (i32, i32) {
    %c0_i32 = arith.constant 0 : i32
    %c0_i32_0 = arith.constant 0 : i32
    %c0_i32_1 = arith.constant 0 : i32
    return %c0_i32, %c0_i32_0 : i32, i32
  }
  func.func @transform_6(%arg0: i32, %arg1: i32) -> (i32, i32, i32) {
    %c0_i32 = arith.constant 0 : i32
    %c0_i32_0 = arith.constant 0 : i32
    return %arg0, %c0_i32, %arg1 : i32, i32, i32
  }
}

</mosaic_0001>

<llo_original>
// kernel: tpu_custom_call.1
$region0: #{tpu_custom_call.1}
  #allocation0 [shape = 'u32[]', space=smem, size = 0x4, offset = 0x4, fixed_abs, tag = 'smem constant byte address 0x4 - core index']
  #allocation1 [shape = 'u32[144,128]{1,0:T(1,128)}', space=vmem, size = 0x12000, scoped, tag = 'internal scratch']
  #allocation2 [shape = 'f32[1,1]{1,0:T(1,128)S(1)}', space=vmem, size = 0x200, scoped, tag = 'scoped memory for tpu_custom_call.1']
  %s0 = inlined_call_operand.vmem [shape: f32[2,64,256], index: 0, kind: input, shape index: {}]
  %s1 = inlined_call_operand.hbm [shape: f32[2,64,256], index: 1, kind: input, shape index: {}]
  %s2 = inlined_call_operand.hbm [shape: bf16[128,128], index: 2, kind: input, shape index: {}]
  %s3 = inlined_call_operand.vmem [shape: f32[128,1], index: 3, kind: input, shape index: {}]
  %s4 = inlined_call_operand.vmem [shape: f32[128,1], index: 4, kind: input, shape index: {}]
  %s5 = inlined_call_operand.<no memory space> [shape: f32[1,1], index: 5, kind: input, shape index: {}]
  %s6 = inlined_call_operand.hbm [shape: f32[2,64,256], index: 6, kind: output, shape index: {}]
  %s7 = sld [smem:[#allocation0]]
  $region65: #{tpu_custom_call.1} parent=0
    _
  %s9 = ssub.s32 1, %s7
  %s10 = scalar_select 0, %s9, %s7
  %v11 = vstv %s5
  %12 = vst [vmem:[#allocation2] sm:$0x1] %v11
  $region1: #{tpu_custom_call.1} parent=0
    #allocation3 [shape = 'u8[131072]{0}', space=vmem, size = 0x20000, scoped, tag = 'input window, operand 1']
    #allocation4 [shape = 's32[2]{0}', space=sflag, size = 0x8, scoped, tag = 'scoped memory for tpu_custom_call.1']
    #allocation5 [shape = 's32[2]{0}', space=sflag, size = 0x8, scoped, tag = 'scoped memory for tpu_custom_call.1']
    #allocation6 [shape = 'u8[32768]{0}', space=vmem, size = 0x8000, scoped, tag = 'input window, operand 2, single buffered']
    #allocation7 [shape = 's32[1]{0}', space=sflag, size = 0x4, scoped, tag = 'scoped memory for tpu_custom_call.1']
    #allocation8 [shape = 'u8[131072]{0}', space=vmem, size = 0x20000, scoped, tag = 'output window, operand 0']
    %13 = vsyncpa [#allocation4], 0
    %s14 = scalar_lea.sflag [#allocation4], 1
    %15 = vsyncpa %s14, 0
    %16 = vsyncpa [#allocation7], 0
    %17 = vsyncpa [#allocation5], 0
    %s18 = scalar_lea.sflag [#allocation5], 1
    %19 = vsyncpa %s18, 0
    loop: start=0, step=1, limit=4
    $region2: #{tpu_custom_call.1} parent=1 // loop_pre_header
      _
    $region3: #{tpu_custom_call.1} parent=1 // loop_header
      %s21 = sphi 0, %s25
      %p22 = scmp.ge.s32.totalorder %s21, 4
      %s28 = sphi 0, %s40
      %s29 = sphi 0, %s36
      %s30 = sphi 0, %s28
      %s31 = sphi 0, %s29
      %s32 = sphi 0, %s30
      %s33 = sphi 0, %s31
      %s45 = sphi 0, %s47
      %s48 = sphi 0, %s45
      %s49 = sphi 0, %s48
      %s65 = sphi 0, %s49
      %s73 = sphi 0, %s75
      %s76 = sphi 0, %s73
      %s77 = sphi 0, %s76
      %s93 = sphi 0, %s77
      %s97 = sphi 0, %s97
      %s99 = sphi 0, %s97
      %s100 = sphi 0, %s99
      %s114 = sphi 0, %s100
      %s118 = sphi 0, %s118
      %s120 = sphi 0, %s118
      %s121 = sphi 0, %s120
      %s135 = sphi 0, %s121
      %s139 = sphi 0, %s139
      %s141 = sphi 0, %s139
      %s142 = sphi 0, %s141
      %s156 = sphi 0, %s142
      %s160 = sphi 0, %s160
      %s162 = sphi 0, %s160
      %s163 = sphi 0, %s162
      %s177 = sphi 0, %s163
      %s185 = sphi 0, %s187
      %s188 = sphi 0, %s185
      %s189 = sphi 0, %s188
      %s205 = sphi 0, %s189
    $region4: #{tpu_custom_call.1} parent=1 // loop_header_branch
      %24 = sbr.rel (%p22) target = $region8
    $region5: #{tpu_custom_call.1} parent=1 // loop_body
      %s26 = ssub.s32 %s21, 1
      %s27 = ssub.s32 %s21, 2
      %s34 = sadd.s32 1, %s29
      %p35 = scmp.ge.s32.totalorder %s34, 1
      %s36 = scalar_select %p35, 0, %s34
      %s37 = sadd.s32 1, %s28
      %s38 = scalar_select %p35, %s37, %s28
      %p39 = scmp.ge.s32.totalorder %s38, 2
      %s40 = scalar_select %p39, 0, %s38
      %s41 = ssub.s32 %s28, %s40
      %s42 = ssub.s32 %s29, %s36
      %s43 = sor.u32 %s41, %s42
      %p44 = scmp.eq.s32.totalorder %s43, 0
      %s46 = sadd.s32 %s45, 1
      %s47 = scalar_select %p44, %s45, %s46
      %p50 = pneg %p44
      %p51 = scmp.eq.s32.totalorder %s21, 1
      %p52 = por %p50, %p51
      %p53 = scmp.ne.s32.totalorder %s45, %s48
      %p54 = scmp.eq.s32.totalorder %s21, 0
      %p55 = por %p53, %p54
      %p56 = scmp.ne.s32.totalorder %s45, %s48
      %p57 = scmp.eq.s32.totalorder %s26, 1
      %p58 = por %p56, %p57
      %p59 = scmp.ne.s32.totalorder %s48, %s49
      %p60 = scmp.eq.s32.totalorder %s26, 0
      %p61 = por %p59, %p60
      %p62 = scmp.ne.s32.totalorder %s48, %s49
      %p63 = scmp.eq.s32.totalorder %s27, 1
      %p64 = por %p62, %p63
      %p66 = scmp.ne.s32.totalorder %s49, %s65
      %p67 = scmp.eq.s32.totalorder %s27, 0
      %p68 = por %p66, %p67
      %s69 = ssub.s32 %s28, %s40
      %s70 = ssub.s32 %s29, %s36
      %s71 = sor.u32 %s69, %s70
      %p72 = scmp.eq.s32.totalorder %s71, 0
      %s74 = sadd.s32 %s73, 1
      %s75 = scalar_select %p72, %s73, %s74
      %p78 = pneg %p72
      %p79 = scmp.eq.s32.totalorder %s21, 1
      %p80 = por %p78, %p79
      %p81 = scmp.ne.s32.totalorder %s73, %s76
      %p82 = scmp.eq.s32.totalorder %s21, 0
      %p83 = por %p81, %p82
      %p84 = scmp.ne.s32.totalorder %s73, %s76
      %p85 = scmp.eq.s32.totalorder %s26, 1
      %p86 = por %p84, %p85
      %p87 = scmp.ne.s32.totalorder %s76, %s77
      %p88 = scmp.eq.s32.totalorder %s26, 0
      %p89 = por %p87, %p88
      %p90 = scmp.ne.s32.totalorder %s76, %s77
      %p91 = scmp.eq.s32.totalorder %s27, 1
      %p92 = por %p90, %p91
      %p94 = scmp.ne.s32.totalorder %s77, %s93
      %p95 = scmp.eq.s32.totalorder %s27, 0
      %p96 = por %p94, %p95
      %s98 = sadd.s32 %s97, 1
      %p101 = scmp.eq.s32.totalorder %s21, 1
      %p102 = scmp.ne.s32.totalorder %s97, %s99
      %p103 = scmp.eq.s32.totalorder %s21, 0
      %p104 = por %p102, %p103
      %p105 = scmp.ne.s32.totalorder %s97, %s99
      %p106 = scmp.eq.s32.totalorder %s26, 1
      %p107 = por %p105, %p106
      %p108 = scmp.ne.s32.totalorder %s99, %s100
      %p109 = scmp.eq.s32.totalorder %s26, 0
      %p110 = por %p108, %p109
      %p111 = scmp.ne.s32.totalorder %s99, %s100
      %p112 = scmp.eq.s32.totalorder %s27, 1
      %p113 = por %p111, %p112
      %p115 = scmp.ne.s32.totalorder %s100, %s114
      %p116 = scmp.eq.s32.totalorder %s27, 0
      %p117 = por %p115, %p116
      %s119 = sadd.s32 %s118, 1
      %p122 = scmp.eq.s32.totalorder %s21, 1
      %p123 = scmp.ne.s32.totalorder %s118, %s120
      %p124 = scmp.eq.s32.totalorder %s21, 0
      %p125 = por %p123, %p124
      %p126 = scmp.ne.s32.totalorder %s118, %s120
      %p127 = scmp.eq.s32.totalorder %s26, 1
      %p128 = por %p126, %p127
      %p129 = scmp.ne.s32.totalorder %s120, %s121
      %p130 = scmp.eq.s32.totalorder %s26, 0
      %p131 = por %p129, %p130
      %p132 = scmp.ne.s32.totalorder %s120, %s121
      %p133 = scmp.eq.s32.totalorder %s27, 1
      %p134 = por %p132, %p133
      %p136 = scmp.ne.s32.totalorder %s121, %s135
      %p137 = scmp.eq.s32.totalorder %s27, 0
      %p138 = por %p136, %p137
      %s140 = sadd.s32 %s139, 1
      %p143 = scmp.eq.s32.totalorder %s21, 1
      %p144 = scmp.ne.s32.totalorder %s139, %s141
      %p145 = scmp.eq.s32.totalorder %s21, 0
      %p146 = por %p144, %p145
      %p147 = scmp.ne.s32.totalorder %s139, %s141
      %p148 = scmp.eq.s32.totalorder %s26, 1
      %p149 = por %p147, %p148
      %p150 = scmp.ne.s32.totalorder %s141, %s142
      %p151 = scmp.eq.s32.totalorder %s26, 0
      %p152 = por %p150, %p151
      %p153 = scmp.ne.s32.totalorder %s141, %s142
      %p154 = scmp.eq.s32.totalorder %s27, 1
      %p155 = por %p153, %p154
      %p157 = scmp.ne.s32.totalorder %s142, %s156
      %p158 = scmp.eq.s32.totalorder %s27, 0
      %p159 = por %p157, %p158
      %s161 = sadd.s32 %s160, 1
      %p164 = scmp.eq.s32.totalorder %s21, 1
      %p165 = scmp.ne.s32.totalorder %s160, %s162
      %p166 = scmp.eq.s32.totalorder %s21, 0
      %p167 = por %p165, %p166
      %p168 = scmp.ne.s32.totalorder %s160, %s162
      %p169 = scmp.eq.s32.totalorder %s26, 1
      %p170 = por %p168, %p169
      %p171 = scmp.ne.s32.totalorder %s162, %s163
      %p172 = scmp.eq.s32.totalorder %s26, 0
      %p173 = por %p171, %p172
      %p174 = scmp.ne.s32.totalorder %s162, %s163
      %p175 = scmp.eq.s32.totalorder %s27, 1
      %p176 = por %p174, %p175
      %p178 = scmp.ne.s32.totalorder %s163, %s177
      %p179 = scmp.eq.s32.totalorder %s27, 0
      %p180 = por %p178, %p179
      %s181 = ssub.s32 %s28, %s40
      %s182 = ssub.s32 %s29, %s36
      %s183 = sor.u32 %s181, %s182
      %p184 = scmp.eq.s32.totalorder %s183, 0
      %s186 = sadd.s32 %s185, 1
      %s187 = scalar_select %p184, %s185, %s186
      %p190 = pneg %p184
      %p191 = scmp.eq.s32.totalorder %s21, 1
      %p192 = por %p190, %p191
      %p193 = scmp.ne.s32.totalorder %s185, %s188
      %p194 = scmp.eq.s32.totalorder %s21, 0
      %p195 = por %p193, %p194
      %p196 = scmp.ne.s32.totalorder %s185, %s188
      %p197 = scmp.eq.s32.totalorder %s26, 1
      %p198 = por %p196, %p197
      %p199 = scmp.ne.s32.totalorder %s188, %s189
      %p200 = scmp.eq.s32.totalorder %s26, 0
      %p201 = por %p199, %p200
      %p202 = scmp.ne.s32.totalorder %s188, %s189
      %p203 = scmp.eq.s32.totalorder %s27, 1
      %p204 = por %p202, %p203
      %p206 = scmp.ne.s32.totalorder %s189, %s205
      %p207 = scmp.eq.s32.totalorder %s27, 0
      %p208 = por %p206, %p207
      %p209 = scmp.le.s32.totalorder 1, %s21
      %p210 = scmp.lt.s32.totalorder %s21, 3
      %p211 = pnand %p209, %p210
      %p212 = pneg %p211
      // Predicated region
      $region9: #{tpu_custom_call.1} parent=5 // pred_check
        _
      $region10: #{tpu_custom_call.1} parent=5 // pred_check_branch
        %214 = sbr.rel (%p211) target = $region12
      $region11: #{tpu_custom_call.1} parent=5 // pred_region
        %s215 = ssub.s32 %s21, 1
        // Predicated region
        $region13: #{tpu_custom_call.1} parent=11 // pred_check
          %p216 = pneg %p110
        $region14: #{tpu_custom_call.1} parent=11 // pred_check_branch
          %218 = sbr.rel (%p216) target = $region16
        $region15: #{tpu_custom_call.1} parent=11 // pred_region
          %s220 = ssub.s32 1024, 1024
          %221 = vsyncadd [#allocation7], %s220
          %s222 = sshll.u32 [#allocation6], 4
          %s223 = int_to_ptr.vmem [resolvable:$true] %s222
          %228 = dma.hbm_to_vmem [thread:$0]  %s2, 1024, %s223, [#allocation7], 64, 64, 4
        $region16: #{tpu_custom_call.1} parent=11 // pred_fallthru
          _
        // Predicated region
        $region17: #{tpu_custom_call.1} parent=11 // pred_check
          %p229 = pneg %p131
        $region18: #{tpu_custom_call.1} parent=11 // pred_check_branch
          %231 = sbr.rel (%p229) target = $region20
        $region19: #{tpu_custom_call.1} parent=11 // pred_region
          _
        $region20: #{tpu_custom_call.1} parent=11 // pred_fallthru
          _
        // Predicated region
        $region21: #{tpu_custom_call.1} parent=11 // pred_check
          %p232 = pneg %p152
        $region22: #{tpu_custom_call.1} parent=11 // pred_check_branch
          %234 = sbr.rel (%p232) target = $region24
        $region23: #{tpu_custom_call.1} parent=11 // pred_region
          _
        $region24: #{tpu_custom_call.1} parent=11 // pred_fallthru
          _
        // Predicated region
        $region25: #{tpu_custom_call.1} parent=11 // pred_check
          %p235 = pneg %p173
        $region26: #{tpu_custom_call.1} parent=11 // pred_check_branch
          %237 = sbr.rel (%p235) target = $region28
        $region27: #{tpu_custom_call.1} parent=11 // pred_region
          _
        $region28: #{tpu_custom_call.1} parent=11 // pred_fallthru
          _
      $region12: #{tpu_custom_call.1} parent=5 // pred_fallthru
        _
      %p238 = scmp.lt.s32.totalorder %s21, 2
      // Predicated region
      $region29: #{tpu_custom_call.1} parent=5 // pred_check
        %p239 = pneg %p238
      $region30: #{tpu_custom_call.1} parent=5 // pred_check_branch
        %241 = sbr.rel (%p239) target = $region32
      $region31: #{tpu_custom_call.1} parent=5 // pred_region
        // Predicated region
        $region33: #{tpu_custom_call.1} parent=31 // pred_check
          %p242 = pneg %p55
        $region34: #{tpu_custom_call.1} parent=31 // pred_check_branch
          %244 = sbr.rel (%p242) target = $region36
        $region35: #{tpu_custom_call.1} parent=31 // pred_region
          %s245 = smul.u32 2, %s29
          %p246 = scmp.lt.s32.totalorder %s28, 1
          %s247 = scalar_select %p246, %s28, 1
          %p248 = scmp.lt.s32.totalorder %s245, 1
          %s249 = scalar_select %p248, %s245, 1
          %s250 = smul.addr %s247, 16
          %s251 = sadd.s32 %s249, %s250
          %s252 = smul.addr %s251, 8
          %s253 = scalar_lea.vmem %s0, %s252
          %s254 = smul.u32 2, %s29
        $region36: #{tpu_custom_call.1} parent=31 // pred_fallthru
          _
        // Predicated region
        $region37: #{tpu_custom_call.1} parent=31 // pred_check
          %p255 = pneg %p83
        $region38: #{tpu_custom_call.1} parent=31 // pred_check_branch
          %257 = sbr.rel (%p255) target = $region40
        $region39: #{tpu_custom_call.1} parent=31 // pred_region
          %s258 = sand.u32 %s73, 1
          %s259 = scalar_lea.sflag [#allocation4], %s258
          %s260 = sand.u32 %s73, 1
          %s261 = smul.addr %s260, 128
          %s262 = scalar_lea.vmem [#allocation3], %s261
          %s263 = smul.u32 2, %s29
          %s265 = ssub.s32 2048, 2048
          %266 = vsyncadd %s259, %s265
          %s267 = smul.addr %s28, 16
          %s268 = sadd.s32 %s263, %s267
          %s269 = smul.addr %s268, 128
          %s270 = scalar_lea.hbm %s1, %s269
          %s271 = sshll.u32 %s262, 4
          %s272 = int_to_ptr.vmem [resolvable:$true] %s271
          %277 = dma.hbm_to_vmem [thread:$0]  %s270, 2048, %s272, %s259, 256, 256, 16
        $region40: #{tpu_custom_call.1} parent=31 // pred_fallthru
          _
      $region32: #{tpu_custom_call.1} parent=5 // pred_fallthru
        _
      %p278 = scmp.le.s32.totalorder 1, %s21
      %p279 = scmp.lt.s32.totalorder %s21, 3
      %p280 = pnand %p278, %p279
      %p281 = pneg %p280
      // Predicated region
      $region41: #{tpu_custom_call.1} parent=5 // pred_check
        _
      $region42: #{tpu_custom_call.1} parent=5 // pred_check_branch
        %283 = sbr.rel (%p280) target = $region44
      $region43: #{tpu_custom_call.1} parent=5 // pred_region
        %s284 = ssub.s32 %s21, 1
        %s285 = sand.u32 %s76, 1
        %s286 = scalar_lea.sflag [#allocation4], %s285
        %s287 = sand.u32 %s76, 1
        %s288 = smul.addr %s287, 128
        %s289 = scalar_lea.vmem [#allocation3], %s288
        // Predicated region
        $region45: #{tpu_custom_call.1} parent=43 // pred_check
          %p290 = pneg %p89
        $region46: #{tpu_custom_call.1} parent=43 // pred_check_branch
          %292 = sbr.rel (%p290) target = $region48
        $region47: #{tpu_custom_call.1} parent=43 // pred_region
          %293 = dma.done %s286, 2048
        $region48: #{tpu_custom_call.1} parent=43 // pred_fallthru
          _
        // Predicated region
        $region49: #{tpu_custom_call.1} parent=43 // pred_check
          %p294 = pneg %p110
        $region50: #{tpu_custom_call.1} parent=43 // pred_check_branch
          %296 = sbr.rel (%p294) target = $region52
        $region51: #{tpu_custom_call.1} parent=43 // pred_region
          %297 = dma.done [#allocation7], 1024
        $region52: #{tpu_custom_call.1} parent=43 // pred_fallthru
          _
        %s298 = smul.u32 2, %s31
        %p299 = scmp.lt.s32.totalorder %s30, 1
        %s300 = scalar_select %p299, %s30, 1
        %p301 = scmp.lt.s32.totalorder %s298, 1
        %s302 = scalar_select %p301, %s298, 1
        %s303 = smul.addr %s300, 16
        %s304 = sadd.s32 %s302, %s303
        %s305 = smul.addr %s304, 8
        %s306 = scalar_lea.vmem %s0, %s305
        %p307 = pneg %p61
        %p308 = pneg %p58
        %s309 = sand.u32 %s76, 1
        %s310 = scalar_lea.sflag [#allocation4], %s309
        %s311 = sand.u32 %s76, 1
        %s312 = smul.addr %s311, 128
        %s313 = scalar_lea.vmem [#allocation3], %s312
        %p314 = pneg %p89
        %p315 = pneg %p86
        %p316 = pneg %p110
        %p317 = pneg %p107
        %p318 = pneg %p131
        %p319 = pneg %p128
        %p320 = pneg %p152
        %p321 = pneg %p149
        %p322 = pneg %p173
        %p323 = pneg %p170
        %p324 = pneg %p201
        %p325 = pneg %p198
        %s326 = sand.u32 %s188, 1
        %s327 = scalar_lea.sflag [#allocation5], %s326
        %s328 = sand.u32 %s188, 1
        %s329 = smul.addr %s328, 128
        %s330 = scalar_lea.vmem [#allocation8], %s329
        %s331 = smul.u32 2, %s31
        %p332 = scmp.lt.s32.totalorder %s30, 1
        %s333 = scalar_select %p332, %s30, 1
        %p334 = scmp.lt.s32.totalorder %s331, 1
        %s335 = scalar_select %p334, %s331, 1
        %s336 = smul.addr %s333, 16
        %s337 = sadd.s32 %s335, %s336
        %s338 = smul.addr %s337, 8
        %s339 = scalar_lea.vmem %s0, %s338
        %s340 = smul.u32 2, %s31
        %s341 = smul.u32 2, %s31
        %s342 = smul.u32 2, %s31
        %v344 = vld [vmem:[#allocation6] sm:$0xf]
        %v345 = vld [vmem:[#allocation6 + $0x4] sm:$0xf]
        %v346 = vld [vmem:[#allocation6 + $0x8] sm:$0xf]
        %v347 = vld [vmem:[#allocation6 + $0xc] sm:$0xf]
        %v348 = vld [vmem:[#allocation6 + $0x10] sm:$0xf]
        %v349 = vld [vmem:[#allocation6 + $0x14] sm:$0xf]
        %v350 = vld [vmem:[#allocation6 + $0x18] sm:$0xf]
        %v351 = vld [vmem:[#allocation6 + $0x1c] sm:$0xf]
        %v352 = vld [vmem:[#allocation6 + $0x20] sm:$0xf]
        %v353 = vld [vmem:[#allocation6 + $0x24] sm:$0xf]
        %v354 = vld [vmem:[#allocation6 + $0x28] sm:$0xf]
        %v355 = vld [vmem:[#allocation6 + $0x2c] sm:$0xf]
        %v356 = vld [vmem:[#allocation6 + $0x30] sm:$0xf]
        %v357 = vld [vmem:[#allocation6 + $0x34] sm:$0xf]
        %v358 = vld [vmem:[#allocation6 + $0x38] sm:$0xf]
        %v359 = vld [vmem:[#allocation6 + $0x3c] sm:$0xf]
        %v360 = vld [vmem:[%s339] sm:$0xff]
        %v361 = vld [vmem:[%s339 + $0x8] sm:$0xff]
        %v362 = vld [vmem:[%s339 + $0x10] sm:$0xff]
        %v363 = vld [vmem:[%s339 + $0x18] sm:$0xff]
        %v364 = vld [vmem:[%s339 + $0x20] sm:$0xff]
        %v365 = vld [vmem:[%s339 + $0x28] sm:$0xff]
        %v366 = vld [vmem:[%s339 + $0x30] sm:$0xff]
        %v367 = vld [vmem:[%s339 + $0x38] sm:$0xff]
        %v368 = vld [vmem:[%s339 + $0x40] sm:$0xff]
        %v369 = vld [vmem:[%s339 + $0x48] sm:$0xff]
        %v370 = vld [vmem:[%s339 + $0x50] sm:$0xff]
        %v371 = vld [vmem:[%s339 + $0x58] sm:$0xff]
        %v372 = vld [vmem:[%s339 + $0x60] sm:$0xff]
        %v373 = vld [vmem:[%s339 + $0x68] sm:$0xff]
        %v374 = vld [vmem:[%s339 + $0x70] sm:$0xff]
        %v375 = vld [vmem:[%s339 + $0x78] sm:$0xff]
        %v376 = vld [vmem:[%s289] sm:$0xff]
        %v377 = vld [vmem:[%s289 + $0x8] sm:$0xff]
        %v378 = vld [vmem:[%s289 + $0x10] sm:$0xff]
        %v379 = vld [vmem:[%s289 + $0x18] sm:$0xff]
        %v380 = vld [vmem:[%s289 + $0x20] sm:$0xff]
        %v381 = vld [vmem:[%s289 + $0x28] sm:$0xff]
        %v382 = vld [vmem:[%s289 + $0x30] sm:$0xff]
        %v383 = vld [vmem:[%s289 + $0x38] sm:$0xff]
        %v384 = vld [vmem:[%s289 + $0x40] sm:$0xff]
        %v385 = vld [vmem:[%s289 + $0x48] sm:$0xff]
        %v386 = vld [vmem:[%s289 + $0x50] sm:$0xff]
        %v387 = vld [vmem:[%s289 + $0x58] sm:$0xff]
        %v388 = vld [vmem:[%s289 + $0x60] sm:$0xff]
        %v389 = vld [vmem:[%s289 + $0x68] sm:$0xff]
        %v390 = vld [vmem:[%s289 + $0x70] sm:$0xff]
        %v391 = vld [vmem:[%s289 + $0x78] sm:$0xff]
        %v392 = vpack.c.bf16 %v362, %v360
        %v393 = vpack.c.bf16 %v363, %v361
        %v394 = vpack.c.bf16 %v366, %v364
        %v395 = vpack.c.bf16 %v367, %v365
        %v396 = vpack.c.bf16 %v370, %v368
        %v397 = vpack.c.bf16 %v371, %v369
        %v398 = vpack.c.bf16 %v374, %v372
        %v399 = vpack.c.bf16 %v375, %v373
        %v400 = vpack.c.bf16 %v378, %v376
        %v401 = vpack.c.bf16 %v379, %v377
        %v402 = vpack.c.bf16 %v382, %v380
        %v403 = vpack.c.bf16 %v383, %v381
        %v404 = vpack.c.bf16 %v386, %v384
        %v405 = vpack.c.bf16 %v387, %v385
        %v406 = vpack.c.bf16 %v390, %v388
        %v407 = vpack.c.bf16 %v391, %v389
        %v408 = vld [vmem:[%s3] sm:$0xff]
        %v409 = vld [vmem:[%s3 + $0x8] sm:$0xff]
        %v410 = vld [vmem:[%s3 + $0x10] sm:$0xff]
        %v411 = vld [vmem:[%s3 + $0x18] sm:$0xff]
        %v412 = vld [vmem:[%s3 + $0x20] sm:$0xff]
        %v413 = vld [vmem:[%s3 + $0x28] sm:$0xff]
        %v414 = vld [vmem:[%s3 + $0x30] sm:$0xff]
        %v415 = vld [vmem:[%s3 + $0x38] sm:$0xff]
        %v416 = vld [vmem:[%s3 + $0x40] sm:$0xff]
        %v417 = vld [vmem:[%s3 + $0x48] sm:$0xff]
        %v418 = vld [vmem:[%s3 + $0x50] sm:$0xff]
        %v419 = vld [vmem:[%s3 + $0x58] sm:$0xff]
        %v420 = vld [vmem:[%s3 + $0x60] sm:$0xff]
        %v421 = vld [vmem:[%s3 + $0x68] sm:$0xff]
        %v422 = vld [vmem:[%s3 + $0x70] sm:$0xff]
        %v423 = vld [vmem:[%s3 + $0x78] sm:$0xff]
        %425 = vset.pattern.permute.xlu0 0
        %426 = vperm.xlu0 %425, %v408
        %v427 = vpop.permute.xlu0 %426
        %430 = vset.pattern.permute.xlu0 0
        %431 = vperm.xlu0 %430, %v409
        %v432 = vpop.permute.xlu0 %431
        %435 = vset.pattern.permute.xlu0 0
        %436 = vperm.xlu0 %435, %v410
        %v437 = vpop.permute.xlu0 %436
        %440 = vset.pattern.permute.xlu0 0
        %441 = vperm.xlu0 %440, %v411
        %v442 = vpop.permute.xlu0 %441
        %445 = vset.pattern.permute.xlu0 0
        %446 = vperm.xlu0 %445, %v412
        %v447 = vpop.permute.xlu0 %446
        %450 = vset.pattern.permute.xlu0 0
        %451 = vperm.xlu0 %450, %v413
        %v452 = vpop.permute.xlu0 %451
        %455 = vset.pattern.permute.xlu0 0
        %456 = vperm.xlu0 %455, %v414
        %v457 = vpop.permute.xlu0 %456
        %460 = vset.pattern.permute.xlu0 0
        %461 = vperm.xlu0 %460, %v415
        %v462 = vpop.permute.xlu0 %461
        %465 = vset.pattern.permute.xlu0 0
        %466 = vperm.xlu0 %465, %v416
        %v467 = vpop.permute.xlu0 %466
        %470 = vset.pattern.permute.xlu0 0
        %471 = vperm.xlu0 %470, %v417
        %v472 = vpop.permute.xlu0 %471
        %475 = vset.pattern.permute.xlu0 0
        %476 = vperm.xlu0 %475, %v418
        %v477 = vpop.permute.xlu0 %476
        %480 = vset.pattern.permute.xlu0 0
        %481 = vperm.xlu0 %480, %v419
        %v482 = vpop.permute.xlu0 %481
        %485 = vset.pattern.permute.xlu0 0
        %486 = vperm.xlu0 %485, %v420
        %v487 = vpop.permute.xlu0 %486
        %490 = vset.pattern.permute.xlu0 0
        %491 = vperm.xlu0 %490, %v421
        %v492 = vpop.permute.xlu0 %491
        %495 = vset.pattern.permute.xlu0 0
        %496 = vperm.xlu0 %495, %v422
        %v497 = vpop.permute.xlu0 %496
        %500 = vset.pattern.permute.xlu0 0
        %501 = vperm.xlu0 %500, %v423
        %v502 = vpop.permute.xlu0 %501
        %v520 = vunpack.c.l.b16 %v344
        %v521 = vunpack.c.l.b16 %v345
        %v522 = vunpack.c.l.b16 %v346
        %v523 = vunpack.c.l.b16 %v347
        %v524 = vunpack.c.l.b16 %v348
        %v525 = vunpack.c.l.b16 %v349
        %v526 = vunpack.c.l.b16 %v350
        %v527 = vunpack.c.l.b16 %v351
        %v528 = vunpack.c.l.b16 %v352
        %v529 = vunpack.c.l.b16 %v353
        %v530 = vunpack.c.l.b16 %v354
        %v531 = vunpack.c.l.b16 %v355
        %v532 = vunpack.c.l.b16 %v356
        %v533 = vunpack.c.l.b16 %v357
        %v534 = vunpack.c.l.b16 %v358
        %v535 = vunpack.c.l.b16 %v359
        %v536 = vpack.c.b16 %v521, %v520
        %v537 = vpack.c.b16 %v523, %v522
        %v538 = vpack.c.b16 %v525, %v524
        %v539 = vpack.c.b16 %v527, %v526
        %v540 = vpack.c.b16 %v529, %v528
        %v541 = vpack.c.b16 %v531, %v530
        %v542 = vpack.c.b16 %v533, %v532
        %v543 = vpack.c.b16 %v535, %v534
        %552 = vmatprep.subr.bf16.mxu0 %v393
        %553 = vmatpush1.bf16.msra.mxu0 %v392
        %554 = vmatprep.subr.bf16.mxu0 %v395
        %555 = vmatpush1.bf16.msra.mxu0 %v394
        %556 = vmatprep.subr.bf16.mxu0 %v397
        %557 = vmatpush1.bf16.msra.mxu0 %v396
        %558 = vmatprep.subr.bf16.mxu0 %v399
        %559 = vmatpush1.bf16.msra.mxu0 %v398
        %560 = vmatprep.subr.bf16.mxu0 %v401
        %561 = vmatpush1.bf16.msra.mxu0 %v400
        %562 = vmatprep.subr.bf16.mxu0 %v403
        %563 = vmatpush1.bf16.msra.mxu0 %v402
        %564 = vmatprep.subr.bf16.mxu0 %v405
        %565 = vmatpush1.bf16.msra.mxu0 %v404
        %566 = vmatprep.subr.bf16.mxu0 %v407
        %567 = vmatpush1.bf16.msra.mxu0 %v406
        %568 = vmatprep.subr.bf16.mxu0 0
        %569 = vmatpush1.bf16.msra.mxu0 0
        %570 = vmatprep.subr.bf16.mxu0 0
        %571 = vmatpush1.bf16.msra.mxu0 0
        %572 = vmatprep.subr.bf16.mxu0 0
        %573 = vmatpush1.bf16.msra.mxu0 0
        %574 = vmatprep.subr.bf16.mxu0 0
        %575 = vmatpush1.bf16.msra.mxu0 0
        %576 = vmatprep.subr.bf16.mxu0 0
        %577 = vmatpush1.bf16.msra.mxu0 0
        %578 = vmatprep.subr.bf16.mxu0 0
        %579 = vmatpush1.bf16.msra.mxu0 0
        %580 = vmatprep.subr.bf16.mxu0 0
        %581 = vmatpush1.bf16.msra.mxu0 0
        %582 = vmatprep.subr.bf16.mxu0 0
        %583 = vmatpush1.bf16.msra.mxu0 0
        %584 = vmatprep.mubr.bf16.mxu0 0
        %585 = vmatmul.mubr.bf16.gmra.mrb[0].mxu0 %v536
        %v586 = vpop.f32.mrb[0].mxu0
        %v587 = vadd.f32 %v427, %v586
        %v588 = vpop.f32.mrb[0].mxu0
        %v589 = vadd.f32 %v427, %v588
        %v590 = vpop.f32.mrb[0].mxu0
        %v591 = vadd.f32 %v432, %v590
        %v592 = vpop.f32.mrb[0].mxu0
        %v593 = vadd.f32 %v432, %v592
        %594 = vmatprep.mubr.bf16.mxu0 0
        %595 = vmatmul.mubr.bf16.gmra.mrb[0].mxu0 %v537
        %v596 = vpop.f32.mrb[0].mxu0
        %v597 = vadd.f32 %v437, %v596
        %v598 = vpop.f32.mrb[0].mxu0
        %v599 = vadd.f32 %v437, %v598
        %v600 = vpop.f32.mrb[0].mxu0
        %v601 = vadd.f32 %v442, %v600
        %v602 = vpop.f32.mrb[0].mxu0
        %v603 = vadd.f32 %v442, %v602
        %604 = vmatprep.mubr.bf16.mxu0 0
        %605 = vmatmul.mubr.bf16.gmra.mrb[0].mxu0 %v538
        %v606 = vpop.f32.mrb[0].mxu0
        %v607 = vadd.f32 %v447, %v606
        %v608 = vpop.f32.mrb[0].mxu0
        %v609 = vadd.f32 %v447, %v608
        %v610 = vpop.f32.mrb[0].mxu0
        %v611 = vadd.f32 %v452, %v610
        %v612 = vpop.f32.mrb[0].mxu0
        %v613 = vadd.f32 %v452, %v612
        %614 = vmatprep.mubr.bf16.mxu0 0
        %615 = vmatmul.mubr.bf16.gmra.mrb[0].mxu0 %v539
        %v616 = vpop.f32.mrb[0].mxu0
        %v617 = vadd.f32 %v457, %v616
        %v618 = vpop.f32.mrb[0].mxu0
        %v619 = vadd.f32 %v457, %v618
        %v620 = vpop.f32.mrb[0].mxu0
        %v621 = vadd.f32 %v462, %v620
        %v622 = vpop.f32.mrb[0].mxu0
        %v623 = vadd.f32 %v462, %v622
        %624 = vmatprep.mubr.bf16.mxu0 0
        %625 = vmatmul.mubr.bf16.gmra.mrb[0].mxu0 %v540
        %v626 = vpop.f32.mrb[0].mxu0
        %v627 = vadd.f32 %v467, %v626
        %v628 = vpop.f32.mrb[0].mxu0
        %v629 = vadd.f32 %v467, %v628
        %v630 = vpop.f32.mrb[0].mxu0
        %v631 = vadd.f32 %v472, %v630
        %v632 = vpop.f32.mrb[0].mxu0
        %v633 = vadd.f32 %v472, %v632
        %634 = vmatprep.mubr.bf16.mxu0 0
        %635 = vmatmul.mubr.bf16.gmra.mrb[0].mxu0 %v541
        %v636 = vpop.f32.mrb[0].mxu0
        %v637 = vadd.f32 %v477, %v636
        %v638 = vpop.f32.mrb[0].mxu0
        %v639 = vadd.f32 %v477, %v638
        %v640 = vpop.f32.mrb[0].mxu0
        %v641 = vadd.f32 %v482, %v640
        %v642 = vpop.f32.mrb[0].mxu0
        %v643 = vadd.f32 %v482, %v642
        %644 = vmatprep.mubr.bf16.mxu0 0
        %645 = vmatmul.mubr.bf16.gmra.mrb[0].mxu0 %v542
        %v646 = vpop.f32.mrb[0].mxu0
        %v647 = vadd.f32 %v487, %v646
        %v648 = vpop.f32.mrb[0].mxu0
        %v649 = vadd.f32 %v487, %v648
        %v650 = vpop.f32.mrb[0].mxu0
        %v651 = vadd.f32 %v492, %v650
        %v652 = vpop.f32.mrb[0].mxu0
        %v653 = vadd.f32 %v492, %v652
        %654 = vmatprep.mubr.bf16.mxu0 0
        %655 = vmatmul.mubr.bf16.gmra.mrb[0].mxu0 %v543
        %v656 = vpop.f32.mrb[0].mxu0
        %v657 = vadd.f32 %v497, %v656
        %v658 = vpop.f32.mrb[0].mxu0
        %v659 = vadd.f32 %v497, %v658
        %v660 = vpop.f32.mrb[0].mxu0
        %v661 = vadd.f32 %v502, %v660
        %v662 = vpop.f32.mrb[0].mxu0
        %v663 = vadd.f32 %v502, %v662
        %664 = vdwg.mxu0
        %v665 = vmax.f32 %v587, 0.0
        %v666 = vmax.f32 %v589, 0.0
        %v667 = vmax.f32 %v591, 0.0
        %v668 = vmax.f32 %v593, 0.0
        %v669 = vmax.f32 %v597, 0.0
        %v670 = vmax.f32 %v599, 0.0
        %v671 = vmax.f32 %v601, 0.0
        %v672 = vmax.f32 %v603, 0.0
        %v673 = vmax.f32 %v607, 0.0
        %v674 = vmax.f32 %v609, 0.0
        %v675 = vmax.f32 %v611, 0.0
        %v676 = vmax.f32 %v613, 0.0
        %v677 = vmax.f32 %v617, 0.0
        %v678 = vmax.f32 %v619, 0.0
        %v679 = vmax.f32 %v621, 0.0
        %v680 = vmax.f32 %v623, 0.0
        %v681 = vmax.f32 %v627, 0.0
        %v682 = vmax.f32 %v629, 0.0
        %v683 = vmax.f32 %v631, 0.0
        %v684 = vmax.f32 %v633, 0.0
        %v685 = vmax.f32 %v637, 0.0
        %v686 = vmax.f32 %v639, 0.0
        %v687 = vmax.f32 %v641, 0.0
        %v688 = vmax.f32 %v643, 0.0
        %v689 = vmax.f32 %v647, 0.0
        %v690 = vmax.f32 %v649, 0.0
        %v691 = vmax.f32 %v651, 0.0
        %v692 = vmax.f32 %v653, 0.0
        %v693 = vmax.f32 %v657, 0.0
        %v694 = vmax.f32 %v659, 0.0
        %v695 = vmax.f32 %v661, 0.0
        %v696 = vmax.f32 %v663, 0.0
        %v697 = vld [vmem:[%s4] sm:$0xff]
        %v698 = vld [vmem:[%s4 + $0x8] sm:$0xff]
        %v699 = vld [vmem:[%s4 + $0x10] sm:$0xff]
        %v700 = vld [vmem:[%s4 + $0x18] sm:$0xff]
        %v701 = vld [vmem:[%s4 + $0x20] sm:$0xff]
        %v702 = vld [vmem:[%s4 + $0x28] sm:$0xff]
        %v703 = vld [vmem:[%s4 + $0x30] sm:$0xff]
        %v704 = vld [vmem:[%s4 + $0x38] sm:$0xff]
        %v705 = vld [vmem:[%s4 + $0x40] sm:$0xff]
        %v706 = vld [vmem:[%s4 + $0x48] sm:$0xff]
        %v707 = vld [vmem:[%s4 + $0x50] sm:$0xff]
        %v708 = vld [vmem:[%s4 + $0x58] sm:$0xff]
        %v709 = vld [vmem:[%s4 + $0x60] sm:$0xff]
        %v710 = vld [vmem:[%s4 + $0x68] sm:$0xff]
        %v711 = vld [vmem:[%s4 + $0x70] sm:$0xff]
        %v712 = vld [vmem:[%s4 + $0x78] sm:$0xff]
        %714 = vset.pattern.permute.xlu0 0
        %715 = vperm.xlu0 %714, %v697
        %v716 = vpop.permute.xlu0 %715
        %719 = vset.pattern.permute.xlu0 0
        %720 = vperm.xlu0 %719, %v698
        %v721 = vpop.permute.xlu0 %720
        %724 = vset.pattern.permute.xlu0 0
        %725 = vperm.xlu0 %724, %v699
        %v726 = vpop.permute.xlu0 %725
        %729 = vset.pattern.permute.xlu0 0
        %730 = vperm.xlu0 %729, %v700
        %v731 = vpop.permute.xlu0 %730
        %734 = vset.pattern.permute.xlu0 0
        %735 = vperm.xlu0 %734, %v701
        %v736 = vpop.permute.xlu0 %735
        %739 = vset.pattern.permute.xlu0 0
        %740 = vperm.xlu0 %739, %v702
        %v741 = vpop.permute.xlu0 %740
        %744 = vset.pattern.permute.xlu0 0
        %745 = vperm.xlu0 %744, %v703
        %v746 = vpop.permute.xlu0 %745
        %749 = vset.pattern.permute.xlu0 0
        %750 = vperm.xlu0 %749, %v704
        %v751 = vpop.permute.xlu0 %750
        %754 = vset.pattern.permute.xlu0 0
        %755 = vperm.xlu0 %754, %v705
        %v756 = vpop.permute.xlu0 %755
        %759 = vset.pattern.permute.xlu0 0
        %760 = vperm.xlu0 %759, %v706
        %v761 = vpop.permute.xlu0 %760
        %764 = vset.pattern.permute.xlu0 0
        %765 = vperm.xlu0 %764, %v707
        %v766 = vpop.permute.xlu0 %765
        %769 = vset.pattern.permute.xlu0 0
        %770 = vperm.xlu0 %769, %v708
        %v771 = vpop.permute.xlu0 %770
        %774 = vset.pattern.permute.xlu0 0
        %775 = vperm.xlu0 %774, %v709
        %v776 = vpop.permute.xlu0 %775
        %779 = vset.pattern.permute.xlu0 0
        %780 = vperm.xlu0 %779, %v710
        %v781 = vpop.permute.xlu0 %780
        %784 = vset.pattern.permute.xlu0 0
        %785 = vperm.xlu0 %784, %v711
        %v786 = vpop.permute.xlu0 %785
        %789 = vset.pattern.permute.xlu0 0
        %790 = vperm.xlu0 %789, %v712
        %v791 = vpop.permute.xlu0 %790
        %v793 = vmul.f32 %v665, %v716
        %v794 = vmul.f32 %v666, %v716
        %v795 = vmul.f32 %v667, %v721
        %v796 = vmul.f32 %v668, %v721
        %v797 = vmul.f32 %v669, %v726
        %v798 = vmul.f32 %v670, %v726
        %v799 = vmul.f32 %v671, %v731
        %v800 = vmul.f32 %v672, %v731
        %v801 = vmul.f32 %v673, %v736
        %v802 = vmul.f32 %v674, %v736
        %v803 = vmul.f32 %v675, %v741
        %v804 = vmul.f32 %v676, %v741
        %v805 = vmul.f32 %v677, %v746
        %v806 = vmul.f32 %v678, %v746
        %v807 = vmul.f32 %v679, %v751
        %v808 = vmul.f32 %v680, %v751
        %v809 = vmul.f32 %v681, %v756
        %v810 = vmul.f32 %v682, %v756
        %v811 = vmul.f32 %v683, %v761
        %v812 = vmul.f32 %v684, %v761
        %v813 = vmul.f32 %v685, %v766
        %v814 = vmul.f32 %v686, %v766
        %v815 = vmul.f32 %v687, %v771
        %v816 = vmul.f32 %v688, %v771
        %v817 = vmul.f32 %v689, %v776
        %v818 = vmul.f32 %v690, %v776
        %v819 = vmul.f32 %v691, %v781
        %v820 = vmul.f32 %v692, %v781
        %v821 = vmul.f32 %v693, %v786
        %v822 = vmul.f32 %v694, %v786
        %v823 = vmul.f32 %v695, %v791
        %v824 = vmul.f32 %v696, %v791
        %v825 = vadd.f32 %v793, %v795
        %v826 = vadd.f32 %v825, %v797
        %v827 = vadd.f32 %v826, %v799
        %v828 = vadd.f32 %v827, %v801
        %v829 = vadd.f32 %v828, %v803
        %v830 = vadd.f32 %v829, %v805
        %v831 = vadd.f32 %v830, %v807
        %v832 = vadd.f32 %v831, %v809
        %v833 = vadd.f32 %v832, %v811
        %v834 = vadd.f32 %v833, %v813
        %v835 = vadd.f32 %v834, %v815
        %v836 = vadd.f32 %v835, %v817
        %v837 = vadd.f32 %v836, %v819
        %v838 = vadd.f32 %v837, %v821
        %v839 = vadd.f32 %v838, %v823
        %v840 = vrot.slane %v839, 4
        %v841 = vadd.f32 %v839, %v840
        %v842 = vrot.slane %v841, 2
        %v843 = vadd.f32 %v841, %v842
        %v844 = vrot.slane %v843, 1
        %v845 = vadd.f32 %v843, %v844
        %v846 = vadd.f32 %v794, %v796
        %v847 = vadd.f32 %v846, %v798
        %v848 = vadd.f32 %v847, %v800
        %v849 = vadd.f32 %v848, %v802
        %v850 = vadd.f32 %v849, %v804
        %v851 = vadd.f32 %v850, %v806
        %v852 = vadd.f32 %v851, %v808
        %v853 = vadd.f32 %v852, %v810
        %v854 = vadd.f32 %v853, %v812
        %v855 = vadd.f32 %v854, %v814
        %v856 = vadd.f32 %v855, %v816
        %v857 = vadd.f32 %v856, %v818
        %v858 = vadd.f32 %v857, %v820
        %v859 = vadd.f32 %v858, %v822
        %v860 = vadd.f32 %v859, %v824
        %v861 = vrot.slane %v860, 4
        %v862 = vadd.f32 %v860, %v861
        %v863 = vrot.slane %v862, 2
        %v864 = vadd.f32 %v862, %v863
        %v865 = vrot.slane %v864, 1
        %v866 = vadd.f32 %v864, %v865
        %v867 = vld [vmem:[#allocation2] sm:$0x1]
        %869 = vset.pattern.permute.xlu0 0
        %870 = vperm.xlu0 %869, %v867
        %v871 = vpop.permute.xlu0 %870
        %v873 = vlaneseq
        %v874 = vshrl.u32 %v873, 7
        %v875 = vsub.s32 0, %v874
        %v876 = vrot.slane %v871, %v875
        %v877 = vadd.f32 %v845, %v876
        %v878 = vadd.f32 %v866, %v876
        %v879 = vsub.f32 0.0, %v877
        %v880 = vsub.f32 0.0, %v878
        %v881 = vmul.f32 %v879, 1.442695
        %v882 = vpow.pop %v881
        %v883 = vmul.f32 %v880, 1.442695
        %v884 = vpow.pop %v883
        %v885 = vadd.f32 %v882, 1.0
        %v886 = vadd.f32 %v884, 1.0
        %v887 = vrcp.pop %v885
        %v888 = vrcp.pop %v886
        %v889 = vmul.f32 %v376, %v887
        %v890 = vmul.f32 %v377, %v888
        %v891 = vmul.f32 %v378, %v887
        %v892 = vmul.f32 %v379, %v888
        %v893 = vmul.f32 %v380, %v887
        %v894 = vmul.f32 %v381, %v888
        %v895 = vmul.f32 %v382, %v887
        %v896 = vmul.f32 %v383, %v888
        %v897 = vmul.f32 %v384, %v887
        %v898 = vmul.f32 %v385, %v888
        %v899 = vmul.f32 %v386, %v887
        %v900 = vmul.f32 %v387, %v888
        %v901 = vmul.f32 %v388, %v887
        %v902 = vmul.f32 %v389, %v888
        %v903 = vmul.f32 %v390, %v887
        %v904 = vmul.f32 %v391, %v888
        %905 = vst [vmem:[%s330] sm:$0xff] %v889
        %906 = vst [vmem:[%s330 + $0x8] sm:$0xff] %v890
        %907 = vst [vmem:[%s330 + $0x10] sm:$0xff] %v891
        %908 = vst [vmem:[%s330 + $0x18] sm:$0xff] %v892
        %909 = vst [vmem:[%s330 + $0x20] sm:$0xff] %v893
        %910 = vst [vmem:[%s330 + $0x28] sm:$0xff] %v894
        %911 = vst [vmem:[%s330 + $0x30] sm:$0xff] %v895
        %912 = vst [vmem:[%s330 + $0x38] sm:$0xff] %v896
        %913 = vst [vmem:[%s330 + $0x40] sm:$0xff] %v897
        %914 = vst [vmem:[%s330 + $0x48] sm:$0xff] %v898
        %915 = vst [vmem:[%s330 + $0x50] sm:$0xff] %v899
        %916 = vst [vmem:[%s330 + $0x58] sm:$0xff] %v900
        %917 = vst [vmem:[%s330 + $0x60] sm:$0xff] %v901
        %918 = vst [vmem:[%s330 + $0x68] sm:$0xff] %v902
        %919 = vst [vmem:[%s330 + $0x70] sm:$0xff] %v903
        %920 = vst [vmem:[%s330 + $0x78] sm:$0xff] %v904
        %s921 = sand.u32 %s188, 1
        %s922 = scalar_lea.sflag [#allocation5], %s921
        %s923 = sand.u32 %s188, 1
        %s924 = smul.addr %s923, 128
        %s925 = scalar_lea.vmem [#allocation8], %s924
        // Predicated region
        $region53: #{tpu_custom_call.1} parent=43 // pred_check
          %p926 = pneg %p198
        $region54: #{tpu_custom_call.1} parent=43 // pred_check_branch
          %928 = sbr.rel (%p926) target = $region56
        $region55: #{tpu_custom_call.1} parent=43 // pred_region
          %s929 = smul.u32 2, %s31
          %s931 = ssub.s32 2048, 2048
          %932 = vsyncadd %s922, %s931
          %s933 = smul.addr %s30, 16
          %s934 = sadd.s32 %s929, %s933
          %s935 = smul.addr %s934, 128
          %s936 = scalar_lea.hbm %s6, %s935
          %s937 = sshll.u32 %s925, 4
          %s938 = int_to_ptr.vmem [resolvable:$true] %s937
          %943 = dma.vmem_to_hbm [thread:$0]  %s938, 2048, %s936, %s922, 256, 256, 16
        $region56: #{tpu_custom_call.1} parent=43 // pred_fallthru
          _
      $region44: #{tpu_custom_call.1} parent=5 // pred_fallthru
        _
      %p944 = scmp.le.s32.totalorder 2, %s21
      // Predicated region
      $region57: #{tpu_custom_call.1} parent=5 // pred_check
        %p945 = pneg %p944
      $region58: #{tpu_custom_call.1} parent=5 // pred_check_branch
        %947 = sbr.rel (%p945) target = $region60
      $region59: #{tpu_custom_call.1} parent=5 // pred_region
        %s948 = ssub.s32 %s21, 2
        // Predicated region
        $region61: #{tpu_custom_call.1} parent=59 // pred_check
          %p949 = pneg %p204
        $region62: #{tpu_custom_call.1} parent=59 // pred_check_branch
          %951 = sbr.rel (%p949) target = $region64
        $region63: #{tpu_custom_call.1} parent=59 // pred_region
          %s952 = sand.u32 %s189, 1
          %s953 = scalar_lea.sflag [#allocation5], %s952
          %s954 = sand.u32 %s189, 1
          %s955 = smul.addr %s954, 128
          %s956 = scalar_lea.vmem [#allocation8], %s955
          %957 = dma.done %s953, 2048
        $region64: #{tpu_custom_call.1} parent=59 // pred_fallthru
          _
      $region60: #{tpu_custom_call.1} parent=5 // pred_fallthru
        _
    $region6: #{tpu_custom_call.1} parent=1 // loop_footer
      %s25 = sadd.s32 1, %s21
    $region7: #{tpu_custom_call.1} parent=1 // loop_footer_branch
      %20 = sbr.rel target = $region3
    $region8: #{tpu_custom_call.1} parent=1 // loop_exit
      _
    %958 = vsyncpa [#allocation4], 1
    %s959 = scalar_lea.sflag [#allocation4], 1
    %960 = vsyncpa %s959, 1
    %961 = vsyncpa [#allocation7], 1
    %962 = vsyncpa [#allocation5], 1
    %s963 = scalar_lea.sflag [#allocation5], 1
    %964 = vsyncpa %s963, 1

</llo_original>
